<compile_context>
chip_gen: v5e
topology: v5e:2x2
jax: 0.10.0
libtpu: 0.0.40
codegen_flags: <defaults>
</compile_context>

<pallas_src>
import functools

import jax
import jax.numpy as jnp
from jax import lax
from jax.experimental import pallas as pl
from jax.experimental.pallas import tpu as pltpu

EMB_DIM = 64
NUM_TARGETS = EMB_DIM * 2 + 16          # 144, matches finetune_ENDE.num_targets
LEAKY_SLOPE = 0.01                      # nn.LeakyReLU default negative_slope
_NEG = float(jnp.finfo(jnp.float32).min)


# ---------------------------------------------------------------------------
# Fused kernel: tiled scatter mean/max  +  both MLP heads (concat-free)
# ---------------------------------------------------------------------------
def _fused_kernel(idx_row_ref, idx_col_ref, feat_ref, lat_ref,
                  w1_ref, wmid_ref, wlast_ref, bias_ref,
                  out_ref,
                  sum_ref, cnt_ref, max_ref):
    t = pl.program_id(0)
    nt = pl.num_programs(0)
    b, d = sum_ref.shape

    @pl.when(t == 0)
    def _init():
        sum_ref[...] = jnp.zeros_like(sum_ref)
        cnt_ref[...] = jnp.zeros_like(cnt_ref)
        max_ref[...] = jnp.full_like(max_ref, _NEG)

    # node-feature tile; upcast once (bf16 streaming path; no-op for f32)
    feats = feat_ref[...].astype(jnp.float32)                 # [TN, D]
    idx_row = idx_row_ref[...]                                # [1,  TN] i32
    idx_col = idx_col_ref[...]                                # [TN, 1 ] i32
    tn = idx_row.shape[1]

    # --- segment sums (MXU) + counts (XLU lane-reduce) -----------------------
    seg = lax.broadcasted_iota(jnp.int32, (b, tn), 0)         # seg[g, n] = g
    mask_f = (seg == idx_row).astype(jnp.float32)             # [B, TN]
    sum_ref[...] += jnp.dot(mask_f, feats, preferred_element_type=jnp.float32)
    cnt_ref[...] += jnp.sum(mask_f, axis=-1, keepdims=True)   # [B, 1]

    # --- running segment max: per-graph masked sublane-reduce ----------------
    # Peak intermediate is one [TN, D] slab (not [B, TN, D]).  b is a static
    # trace-time constant, so this Python loop is fully unrolled.
    # TODO(synk): switch to pl.loop / 2-TC partial reduce for very large B.
    for g in range(b):
        mg = jnp.where(idx_col == g, feats, _NEG)             # [TN, D]
        max_ref[g:g + 1, :] = jnp.maximum(
            max_ref[g:g + 1, :], jnp.max(mg, axis=0, keepdims=True))

    @pl.when(t == nt - 1)
    def _finalize():
        def mm(x, w):
            return jnp.dot(x, w, preferred_element_type=jnp.float32)

        def leaky(v):
            return jnp.where(v > 0, v, LEAKY_SLOPE * v)

        def relu(v):
            return jnp.maximum(v, 0.0)

        mean = sum_ref[...] / jnp.maximum(cnt_ref[...], 1.0)   # [B, D]
        mx = max_ref[...]                                      # [B, D]
        lat = lat_ref[...]                                     # [B, 16]

        # merged first layers, split by input block (no lane concat):
        #   W1 rows 0:D -> mean, D:2D -> max, 2D: -> latent
        z = (mm(mean, w1_ref[0:d, :])
             + mm(mx, w1_ref[d:2 * d, :])
             + mm(lat, w1_ref[2 * d:, :]))                     # [B, 256]
        x = leaky(z[:, :128] + bias_ref[0:1, :])               # fc_out.fc1
        y = relu(z[:, 128:] + bias_ref[1:2, :])                # classifier.fc1

        x = leaky(mm(x, wmid_ref[0]) + bias_ref[2:3, :])       # fc_out.fc2
        x = leaky(mm(x, wmid_ref[1]) + bias_ref[3:4, :])       # fc_out.fc3
        y = relu(mm(y, wmid_ref[2]) + bias_ref[4:5, :])        # classifier.fc2

        # merged last layers -> one lane-dense [B, 128] packed store
        out_ref[...] = (mm(x, wlast_ref[0:128, :])
                        + mm(y, wlast_ref[128:, :])
                        + bias_ref[5:6, :])


# ---------------------------------------------------------------------------
# Wrapper: pad/merge weights, pad node axis, build grid/BlockSpecs
# ---------------------------------------------------------------------------
def _place(shape, *blocks):
    out = jnp.zeros(shape, jnp.float32)
    for arr, r, c in blocks:
        out = out.at[r:r + arr.shape[0], c:c + arr.shape[1]].set(arr)
    return out


def _fused_forward(hidden_atom, batch_idx, latent, params,
                   num_graphs, num_classes, node_tile, feat_dtype):
    n, d = hidden_atom.shape
    b = num_graphs
    lat = latent.reshape(b, -1).astype(jnp.float32)
    lat_dim = lat.shape[1]

    (w1, b1, w2, b2, w3, b3, w4, b4,
     cw1, cb1, cw2, cb2, cw3, cb3) = params
    assert w1.shape[0] == 2 * d + lat_dim
    assert max(w1.shape[1], w2.shape[1], w3.shape[1], cw1.shape[1],
               num_classes + 1) <= 128

    # --- merged / zero-padded weights (pad lanes carry zero activations) -----
    w1cat = _place((2 * d + lat_dim, 256), (w1, 0, 0), (cw1, 0, 128))  # [144,256]
    wmid = jnp.stack([_place((128, 128), (w2, 0, 0)),                  # fc_out.fc2
                      _place((128, 128), (w3, 0, 0)),                  # fc_out.fc3
                      _place((128, 128), (cw2, 0, 0))])                # clf.fc2
    wlast = _place((256, 128), (w4, 0, 0), (cw3, 128, 1))              # [256,128]
    bias = jnp.concatenate([
        _place((1, 128), (b1, 0, 0)),
        _place((1, 128), (cb1, 0, 0)),
        _place((1, 128), (b2, 0, 0)),
        _place((1, 128), (b3, 0, 0)),
        _place((1, 128), (cb2, 0, 0)),
        _place((1, 128), (b4, 0, 0), (cb3, 0, 1)),
    ], axis=0)                                                          # [6, 128]

    # --- node-axis padding / tiling (tile multiple of 128, lane-aligned idx) -
    assert node_tile % 128 == 0
    tn = min(node_tile, ((n + 127) // 128) * 128)
    n_pad = ((n + tn - 1) // tn) * tn
    feats_p = jnp.pad(hidden_atom.astype(feat_dtype), ((0, n_pad - n), (0, 0)))
    idx = jnp.full((n_pad,), b, jnp.int32).at[:n].set(batch_idx.astype(jnp.int32))
    idx_row = idx.reshape(1, n_pad)     # lane orientation (sum/count mask)
    idx_col = idx.reshape(n_pad, 1)     # sublane orientation (max mask)
    grid = (n_pad // tn,)

    def _resident(a):   # full-block operand, constant index_map -> DMA'd once
        return pl.BlockSpec(a.shape, lambda t, _z=(0,) * a.ndim: _z)

    packed = pl.pallas_call(
        _fused_kernel,
        out_shape=jax.ShapeDtypeStruct((b, 128), jnp.float32),
        grid_spec=pltpu.PrefetchScalarGridSpec(
            num_scalar_prefetch=0,
            grid=grid,
            in_specs=[
                pl.BlockSpec((1, tn), lambda t: (0, t)),   # idx (row form)
                pl.BlockSpec((tn, 1), lambda t: (t, 0)),   # idx (column form)
                pl.BlockSpec((tn, d), lambda t: (t, 0)),   # node features tile
                _resident(lat),
                _resident(w1cat), _resident(wmid),
                _resident(wlast), _resident(bias),
            ],
            out_specs=pl.BlockSpec((b, 128), lambda t: (0, 0)),
            scratch_shapes=[pltpu.VMEM((b, d), jnp.float32),   # segment sums
                            pltpu.VMEM((b, 1), jnp.float32),   # counts
                            pltpu.VMEM((b, d), jnp.float32)],  # running max
        ),
        compiler_params=pltpu.CompilerParams(
            dimension_semantics=("arbitrary",),
            vmem_limit_bytes=32 * 1024 * 1024),
    )(idx_row, idx_col, feats_p, lat, w1cat, wmid, wlast, bias)

    target = packed[:, :1]
    logits = packed[:, 1:1 + num_classes]
    return target, logits


# ---------------------------------------------------------------------------
# Parameter initialization (deterministic, PyTorch nn.Linear-style uniform)
# ---------------------------------------------------------------------------
def _linear_params(key, in_f, out_f):
    kw, kb = jax.random.split(key)
    bound = float(in_f) ** -0.5
    w = jax.random.uniform(kw, (in_f, out_f), jnp.float32, -bound, bound)
    b = jax.random.uniform(kb, (1, out_f), jnp.float32, -bound, bound)
    return w, b


def init_params(key, num_targets, num_classes):
    keys = jax.random.split(key, 7)
    w1, b1 = _linear_params(keys[0], num_targets, num_targets // 2)
    w2, b2 = _linear_params(keys[1], num_targets // 2, num_targets // 4)
    w3, b3 = _linear_params(keys[2], num_targets // 4, num_targets // 8)
    w4, b4 = _linear_params(keys[3], num_targets // 8, 1)
    cw1, cb1 = _linear_params(keys[4], num_targets, num_targets // 2)       # SimpleClassifier.fc1
    cw2, cb2 = _linear_params(keys[5], num_targets // 2, num_targets // 2)  # .fc2
    cw3, cb3 = _linear_params(keys[6], num_targets // 2, num_classes)       # .fc3
    return (w1, b1, w2, b2, w3, b3, w4, b4, cw1, cb1, cw2, cb2, cw3, cb3)


# ---------------------------------------------------------------------------
# finetune_ENDE.forward (mode='train' returns (target, target_class))
# ---------------------------------------------------------------------------
@functools.partial(jax.jit,
                   static_argnames=("num_graphs", "num_classes", "mode",
                                    "node_tile", "feat_dtype"))
def finetune_ende_forward(hidden_atom, batch_idx, latent1_coord, params,
                          num_graphs, num_classes, mode="train",
                          node_tile=1024, feat_dtype=jnp.float32):
    target, target_class = _fused_forward(
        hidden_atom, batch_idx, latent1_coord, params,
        num_graphs, num_classes, node_tile, feat_dtype)
    if mode == "train":
        return target, target_class
    return target


# ---------------------------------------------------------------------------
# pure-JAX reference (correctness sanity check)
# ---------------------------------------------------------------------------
def _reference(hidden_atom, batch_idx, latent, params, num_graphs):
    seg_sum = jax.ops.segment_sum(hidden_atom, batch_idx, num_graphs)
    counts = jax.ops.segment_sum(jnp.ones((hidden_atom.shape[0], 1)),
                                 batch_idx, num_graphs)
    mean = seg_sum / jnp.maximum(counts, 1.0)
    mx = jax.ops.segment_max(hidden_atom, batch_idx, num_graphs)
    h = jnp.concatenate([mean, mx, latent.reshape(num_graphs, -1)], axis=-1)
    (w1, b1, w2, b2, w3, b3, w4, b4, cw1, cb1, cw2, cb2, cw3, cb3) = params
    leaky = lambda x: jnp.where(x > 0, x, LEAKY_SLOPE * x)
    x = leaky(h @ w1 + b1)
    x = leaky(x @ w2 + b2)
    x = leaky(x @ w3 + b3)
    t = x @ w4 + b4
    y = jnp.maximum(h @ cw1 + cb1, 0.0)
    y = jnp.maximum(y @ cw2 + cb2, 0.0)
    l = y @ cw3 + cb3
    return t, l


if __name__ == "__main__":
    key = jax.random.PRNGKey(0)
    k1, k2, kp = jax.random.split(key, 3)

    B = 2          # graphs per batch
    N = 8          # total nodes across the batch
    C = 8          # bin_num -> num_classes

    # synthetic stand-ins for the external sub-module outputs
    hidden_atom = jax.random.normal(k1, (N, EMB_DIM), jnp.float32)   # encoder node feats
    batch_idx = jnp.array([0, 0, 0, 1, 1, 1, 1, 1], jnp.int32)       # node -> graph id
    latent1_coord = jax.random.normal(k2, (B, 4, 4), jnp.float32)    # MAE latent -> [B, 16]
    params = init_params(kp, NUM_TARGETS, C)

    # f32 streaming path
    target, target_class = finetune_ende_forward(
        hidden_atom, batch_idx, latent1_coord, params,
        num_graphs=B, num_classes=C, mode="train")
    jax.block_until_ready((target, target_class))

    t_ref, c_ref = _reference(hidden_atom, batch_idx, latent1_coord, params, B)
    assert target.shape == (B, 1) and target_class.shape == (B, C)
    assert jnp.allclose(target, t_ref, rtol=1e-3, atol=1e-3)
    assert jnp.allclose(target_class, c_ref, rtol=1e-3, atol=1e-3)

    # bf16 feature-streaming path (HBM-traffic optimization); compare against a
    # reference fed the same bf16-rounded inputs so tolerance stays tight.
    t_bf, c_bf = finetune_ende_forward(
        hidden_atom, batch_idx, latent1_coord, params,
        num_graphs=B, num_classes=C, mode="train", feat_dtype=jnp.bfloat16)
    jax.block_until_ready((t_bf, c_bf))
    ha_bf = hidden_atom.astype(jnp.bfloat16).astype(jnp.float32)
    t_ref_bf, c_ref_bf = _reference(ha_bf, batch_idx, latent1_coord, params, B)
    assert jnp.allclose(t_bf, t_ref_bf, rtol=1e-3, atol=1e-3)
    assert jnp.allclose(c_bf, c_ref_bf, rtol=1e-3, atol=1e-3)

    print("KERNEL_OK")
</pallas_src>

<mosaic_0001>
module attributes {stable_mosaic.version = 11 : i64} {
  func.func @_fused_kernel(%arg0: i32, %arg1: memref<1x128xi32, #tpu.memory_space<vmem>>, %arg2: memref<128x1xi32, #tpu.memory_space<vmem>>, %arg3: memref<128x64xf32, #tpu.memory_space<vmem>>, %arg4: memref<2x16xf32, #tpu.memory_space<vmem>>, %arg5: memref<144x256xf32, #tpu.memory_space<vmem>>, %arg6: memref<3x128x128xf32, #tpu.memory_space<vmem>>, %arg7: memref<256x128xf32, #tpu.memory_space<vmem>>, %arg8: memref<6x128xf32, #tpu.memory_space<vmem>>, %arg9: memref<2x128xf32, #tpu.memory_space<vmem>>, %arg10: memref<2x64xf32, #tpu.memory_space<vmem>>, %arg11: memref<2x1xf32, #tpu.memory_space<vmem>>, %arg12: memref<2x64xf32, #tpu.memory_space<vmem>>) attributes {dimension_semantics = [#tpu.dimension_semantics<arbitrary>], iteration_bounds = array<i64: 1>, scalar_prefetch = 0 : i64, scratch_operands = 3 : i64, tpu.core_type = #tpu.core_type<tc>, window_params = [{transform_indices = @transform_0, window_bounds = array<i64: 1, 128>}, {transform_indices = @transform_1, window_bounds = array<i64: 128, 1>}, {transform_indices = @transform_2, window_bounds = array<i64: 128, 64>}, {pipeline_mode = #tpu.pipeline_mode<synchronous>, transform_indices = @transform_3, window_bounds = array<i64: 2, 16>}, {pipeline_mode = #tpu.pipeline_mode<synchronous>, transform_indices = @transform_4, window_bounds = array<i64: 144, 256>}, {pipeline_mode = #tpu.pipeline_mode<synchronous>, transform_indices = @transform_5, window_bounds = array<i64: 3, 128, 128>}, {pipeline_mode = #tpu.pipeline_mode<synchronous>, transform_indices = @transform_6, window_bounds = array<i64: 256, 128>}, {pipeline_mode = #tpu.pipeline_mode<synchronous>, transform_indices = @transform_7, window_bounds = array<i64: 6, 128>}, {pipeline_mode = #tpu.pipeline_mode<synchronous>, transform_indices = @transform_8, window_bounds = array<i64: 2, 128>}]} {
    %c0_i32 = arith.constant 0 : i32
    %0 = arith.cmpi eq, %arg0, %c0_i32 : i32
    %1 = arith.extui %0 : i1 to i32
    %c0_i32_0 = arith.constant 0 : i32
    %2 = arith.cmpi ne, %1, %c0_i32_0 : i32
    scf.if %2 {
      %cst_29 = arith.constant 0.000000e+00 : f32
      %45 = vector.broadcast %cst_29 : f32 to vector<2x64xf32>
      %c0_30 = arith.constant 0 : index
      %c0_31 = arith.constant 0 : index
      %46 = vector.load %arg10[%c0_30, %c0_31] : memref<2x64xf32, #tpu.memory_space<vmem>>, vector<2x64xf32>
      tpu.vector_store %arg10[%c0_30, %c0_31], %45 {strides = array<i32>} : memref<2x64xf32, #tpu.memory_space<vmem>>, vector<2x64xf32>,
      %cst_32 = arith.constant 0.000000e+00 : f32
      %47 = vector.broadcast %cst_32 : f32 to vector<2x1xf32>
      %c0_33 = arith.constant 0 : index
      %c0_34 = arith.constant 0 : index
      %48 = vector.load %arg11[%c0_33, %c0_34] : memref<2x1xf32, #tpu.memory_space<vmem>>, vector<2x1xf32>
      tpu.vector_store %arg11[%c0_33, %c0_34], %47 {strides = array<i32>} : memref<2x1xf32, #tpu.memory_space<vmem>>, vector<2x1xf32>,
      %cst_35 = arith.constant -3.40282347E+38 : f32
      %49 = vector.broadcast %cst_35 : f32 to vector<2x64xf32>
      %c0_36 = arith.constant 0 : index
      %c0_37 = arith.constant 0 : index
      %50 = vector.load %arg12[%c0_36, %c0_37] : memref<2x64xf32, #tpu.memory_space<vmem>>, vector<2x64xf32>
      tpu.vector_store %arg12[%c0_36, %c0_37], %49 {strides = array<i32>} : memref<2x64xf32, #tpu.memory_space<vmem>>, vector<2x64xf32>,
    } else {
    }
    %c0 = arith.constant 0 : index
    %c0_1 = arith.constant 0 : index
    %3 = vector.load %arg3[%c0, %c0_1] : memref<128x64xf32, #tpu.memory_space<vmem>>, vector<128x64xf32>
    %c0_2 = arith.constant 0 : index
    %c0_3 = arith.constant 0 : index
    %4 = vector.load %arg1[%c0_2, %c0_3] : memref<1x128xi32, #tpu.memory_space<vmem>>, vector<1x128xi32>
    %c0_4 = arith.constant 0 : index
    %c0_5 = arith.constant 0 : index
    %5 = vector.load %arg2[%c0_4, %c0_5] : memref<128x1xi32, #tpu.memory_space<vmem>>, vector<128x1xi32>
    %6 = tpu.iota {dimensions = array<i32: 0>} : vector<2x128xi32>
    %7 = vector.broadcast %4 : vector<1x128xi32> to vector<2x128xi32>
    %8 = arith.cmpi eq, %6, %7 : vector<2x128xi32>
    %9 = arith.extui %8 : vector<2x128xi1> to vector<2x128xi32>
    %10 = arith.sitofp %9 : vector<2x128xi32> to vector<2x128xf32>
    %c0_6 = arith.constant 0 : index
    %c0_7 = arith.constant 0 : index
    %11 = vector.load %arg10[%c0_6, %c0_7] : memref<2x64xf32, #tpu.memory_space<vmem>>, vector<2x64xf32>
    %cst = arith.constant dense<0.000000e+00> : vector<2x64xf32>
    %12 = tpu.matmul %10, %3, %cst {dimension_numbers = #tpu.dot_dimension_numbers<[1], [0], [0], [1], [0, 0, 1, 1], [], []>} : vector<2x128xf32>, vector<128x64xf32>, vector<2x64xf32> -> vector<2x64xf32>
    %13 = arith.addf %11, %12 : vector<2x64xf32>
    %c0_8 = arith.constant 0 : index
    %c0_9 = arith.constant 0 : index
    %14 = vector.load %arg10[%c0_8, %c0_9] : memref<2x64xf32, #tpu.memory_space<vmem>>, vector<2x64xf32>
    tpu.vector_store %arg10[%c0_8, %c0_9], %13 {strides = array<i32>} : memref<2x64xf32, #tpu.memory_space<vmem>>, vector<2x64xf32>,
    %c0_10 = arith.constant 0 : index
    %c0_11 = arith.constant 0 : index
    %15 = vector.load %arg11[%c0_10, %c0_11] : memref<2x1xf32, #tpu.memory_space<vmem>>, vector<2x1xf32>
    %cst_12 = arith.constant dense<0.000000e+00> : vector<2xf32>
    %16 = vector.multi_reduction <add>, %10, %cst_12 [1] : vector<2x128xf32> to vector<2xf32>
    %17 = vector.shape_cast %16 : vector<2xf32> to vector<2x1xf32>
    %18 = arith.addf %15, %17 : vector<2x1xf32>
    %c0_13 = arith.constant 0 : index
    %c0_14 = arith.constant 0 : index
    %19 = vector.load %arg11[%c0_13, %c0_14] : memref<2x1xf32, #tpu.memory_space<vmem>>, vector<2x1xf32>
    tpu.vector_store %arg11[%c0_13, %c0_14], %18 {strides = array<i32>} : memref<2x1xf32, #tpu.memory_space<vmem>>, vector<2x1xf32>,
    %c0_i32_15 = arith.constant 0 : i32
    %20 = vector.broadcast %c0_i32_15 : i32 to vector<128x1xi32>
    %21 = arith.cmpi eq, %5, %20 : vector<128x1xi32>
    %cst_16 = arith.constant -3.40282347E+38 : f32
    %22 = vector.shape_cast %21 : vector<128x1xi1> to vector<128x1xi1>
    %23 = vector.broadcast %22 : vector<128x1xi1> to vector<128x64xi1>
    %24 = vector.broadcast %cst_16 : f32 to vector<128x64xf32>
    %25 = arith.select %23, %3, %24 : vector<128x64xi1>, vector<128x64xf32>
    %c0_17 = arith.constant 0 : index
    %c0_18 = arith.constant 0 : index
    %26 = vector.load %arg12[%c0_17, %c0_18] : memref<2x64xf32, #tpu.memory_space<vmem>>, vector<1x64xf32>
    %cst_19 = arith.constant dense<0xFF800000> : vector<64xf32>
    %27 = vector.multi_reduction <maximumf>, %25, %cst_19 [0] : vector<128x64xf32> to vector<64xf32>
    %28 = vector.shape_cast %27 : vector<64xf32> to vector<1x64xf32>
    %29 = arith.maximumf %26, %28 : vector<1x64xf32>
    %c0_20 = arith.constant 0 : index
    %c0_21 = arith.constant 0 : index
    %30 = vector.load %arg12[%c0_20, %c0_21] : memref<2x64xf32, #tpu.memory_space<vmem>>, vector<1x64xf32>
    tpu.vector_store %arg12[%c0_20, %c0_21], %29 {strides = array<i32>} : memref<2x64xf32, #tpu.memory_space<vmem>>, vector<1x64xf32>,
    %c1_i32 = arith.constant 1 : i32
    %31 = vector.broadcast %c1_i32 : i32 to vector<128x1xi32>
    %32 = arith.cmpi eq, %5, %31 : vector<128x1xi32>
    %cst_22 = arith.constant -3.40282347E+38 : f32
    %33 = vector.shape_cast %32 : vector<128x1xi1> to vector<128x1xi1>
    %34 = vector.broadcast %33 : vector<128x1xi1> to vector<128x64xi1>
    %35 = vector.broadcast %cst_22 : f32 to vector<128x64xf32>
    %36 = arith.select %34, %3, %35 : vector<128x64xi1>, vector<128x64xf32>
    %c1 = arith.constant 1 : index
    %c0_23 = arith.constant 0 : index
    %37 = vector.load %arg12[%c1, %c0_23] : memref<2x64xf32, #tpu.memory_space<vmem>>, vector<1x64xf32>
    %cst_24 = arith.constant dense<0xFF800000> : vector<64xf32>
    %38 = vector.multi_reduction <maximumf>, %36, %cst_24 [0] : vector<128x64xf32> to vector<64xf32>
    %39 = vector.shape_cast %38 : vector<64xf32> to vector<1x64xf32>
    %40 = arith.maximumf %37, %39 : vector<1x64xf32>
    %c1_25 = arith.constant 1 : index
    %c0_26 = arith.constant 0 : index
    %41 = vector.load %arg12[%c1_25, %c0_26] : memref<2x64xf32, #tpu.memory_space<vmem>>, vector<1x64xf32>
    tpu.vector_store %arg12[%c1_25, %c0_26], %40 {strides = array<i32>} : memref<2x64xf32, #tpu.memory_space<vmem>>, vector<1x64xf32>,
    %c0_i32_27 = arith.constant 0 : i32
    %42 = arith.cmpi eq, %arg0, %c0_i32_27 : i32
    %43 = arith.extui %42 : i1 to i32
    %c0_i32_28 = arith.constant 0 : i32
    %44 = arith.cmpi ne, %43, %c0_i32_28 : i32
    scf.if %44 {
      %c0_29 = arith.constant 0 : index
      %c0_30 = arith.constant 0 : index
      %45 = vector.load %arg10[%c0_29, %c0_30] : memref<2x64xf32, #tpu.memory_space<vmem>>, vector<2x64xf32>
      %c0_31 = arith.constant 0 : index
      %c0_32 = arith.constant 0 : index
      %46 = vector.load %arg11[%c0_31, %c0_32] : memref<2x1xf32, #tpu.memory_space<vmem>>, vector<2x1xf32>
      %cst_33 = arith.constant 1.000000e+00 : f32
      %47 = vector.broadcast %cst_33 : f32 to vector<2x1xf32>
      %48 = arith.maximumf %46, %47 : vector<2x1xf32>
      %49 = vector.broadcast %48 : vector<2x1xf32> to vector<2x64xf32>
      %50 = arith.divf %45, %49 : vector<2x64xf32>
      %c0_34 = arith.constant 0 : index
      %c0_35 = arith.constant 0 : index
      %51 = vector.load %arg12[%c0_34, %c0_35] : memref<2x64xf32, #tpu.memory_space<vmem>>, vector<2x64xf32>
      %c0_36 = arith.constant 0 : index
      %c0_37 = arith.constant 0 : index
      %52 = vector.load %arg4[%c0_36, %c0_37] : memref<2x16xf32, #tpu.memory_space<vmem>>, vector<2x16xf32>
      %c0_38 = arith.constant 0 : index
      %c0_39 = arith.constant 0 : index
      %53 = vector.load %arg5[%c0_38, %c0_39] : memref<144x256xf32, #tpu.memory_space<vmem>>, vector<64x256xf32>
      %cst_40 = arith.constant dense<0.000000e+00> : vector<2x256xf32>
      %54 = tpu.matmul %50, %53, %cst_40 {dimension_numbers = #tpu.dot_dimension_numbers<[1], [0], [0], [1], [0, 0, 1, 1], [], []>} : vector<2x64xf32>, vector<64x256xf32>, vector<2x256xf32> -> vector<2x256xf32>
      %c64 = arith.constant 64 : index
      %c0_41 = arith.constant 0 : index
      %55 = vector.load %arg5[%c64, %c0_41] : memref<144x256xf32, #tpu.memory_space<vmem>>, vector<64x256xf32>
      %cst_42 = arith.constant dense<0.000000e+00> : vector<2x256xf32>
      %56 = tpu.matmul %51, %55, %cst_42 {dimension_numbers = #tpu.dot_dimension_numbers<[1], [0], [0], [1], [0, 0, 1, 1], [], []>} : vector<2x64xf32>, vector<64x256xf32>, vector<2x256xf32> -> vector<2x256xf32>
      %57 = arith.addf %54, %56 : vector<2x256xf32>
      %c128 = arith.constant 128 : index
      %c0_43 = arith.constant 0 : index
      %58 = vector.load %arg5[%c128, %c0_43] : memref<144x256xf32, #tpu.memory_space<vmem>>, vector<16x256xf32>
      %cst_44 = arith.constant dense<0.000000e+00> : vector<2x256xf32>
      %59 = tpu.matmul %52, %58, %cst_44 {dimension_numbers = #tpu.dot_dimension_numbers<[1], [0], [0], [1], [0, 0, 1, 1], [], []>} : vector<2x16xf32>, vector<16x256xf32>, vector<2x256xf32> -> vector<2x256xf32>
      %60 = arith.addf %57, %59 : vector<2x256xf32>
      %61 = vector.extract_strided_slice %60 {offsets = [0, 0], sizes = [2, 128], strides = [1, 1]} : vector<2x256xf32> to vector<2x128xf32>
      %c0_45 = arith.constant 0 : index
      %c0_46 = arith.constant 0 : index
      %62 = vector.load %arg8[%c0_45, %c0_46] : memref<6x128xf32, #tpu.memory_space<vmem>>, vector<1x128xf32>
      %63 = vector.broadcast %62 : vector<1x128xf32> to vector<2x128xf32>
      %64 = arith.addf %61, %63 : vector<2x128xf32>
      %cst_47 = arith.constant 0.000000e+00 : f32
      %65 = vector.broadcast %cst_47 : f32 to vector<2x128xf32>
      %66 = arith.cmpf ogt, %64, %65 : vector<2x128xf32>
      %cst_48 = arith.constant 0.00999999977 : f32
      %67 = vector.broadcast %cst_48 : f32 to vector<2x128xf32>
      %68 = arith.mulf %67, %64 : vector<2x128xf32>
      %69 = arith.select %66, %64, %68 : vector<2x128xi1>, vector<2x128xf32>
      %70 = vector.extract_strided_slice %60 {offsets = [0, 128], sizes = [2, 128], strides = [1, 1]} : vector<2x256xf32> to vector<2x128xf32>
      %c1_49 = arith.constant 1 : index
      %c0_50 = arith.constant 0 : index
      %71 = vector.load %arg8[%c1_49, %c0_50] : memref<6x128xf32, #tpu.memory_space<vmem>>, vector<1x128xf32>
      %72 = vector.broadcast %71 : vector<1x128xf32> to vector<2x128xf32>
      %73 = arith.addf %70, %72 : vector<2x128xf32>
      %cst_51 = arith.constant 0.000000e+00 : f32
      %74 = vector.broadcast %cst_51 : f32 to vector<2x128xf32>
      %75 = arith.maximumf %73, %74 : vector<2x128xf32>
      %c0_52 = arith.constant 0 : index
      %c0_53 = arith.constant 0 : index
      %c0_54 = arith.constant 0 : index
      %76 = vector.load %arg6[%c0_52, %c0_53, %c0_54] : memref<3x128x128xf32, #tpu.memory_space<vmem>>, vector<1x128x128xf32>
      %77 = vector.shape_cast %76 : vector<1x128x128xf32> to vector<128x128xf32>
      %cst_55 = arith.constant dense<0.000000e+00> : vector<2x128xf32>
      %78 = tpu.matmul %69, %77, %cst_55 {dimension_numbers = #tpu.dot_dimension_numbers<[1], [0], [0], [1], [0, 0, 1, 1], [], []>} : vector<2x128xf32>, vector<128x128xf32>, vector<2x128xf32> -> vector<2x128xf32>
      %c2 = arith.constant 2 : index
      %c0_56 = arith.constant 0 : index
      %79 = vector.load %arg8[%c2, %c0_56] : memref<6x128xf32, #tpu.memory_space<vmem>>, vector<1x128xf32>
      %80 = vector.broadcast %79 : vector<1x128xf32> to vector<2x128xf32>
      %81 = arith.addf %78, %80 : vector<2x128xf32>
      %cst_57 = arith.constant 0.000000e+00 : f32
      %82 = vector.broadcast %cst_57 : f32 to vector<2x128xf32>
      %83 = arith.cmpf ogt, %81, %82 : vector<2x128xf32>
      %cst_58 = arith.constant 0.00999999977 : f32
      %84 = vector.broadcast %cst_58 : f32 to vector<2x128xf32>
      %85 = arith.mulf %84, %81 : vector<2x128xf32>
      %86 = arith.select %83, %81, %85 : vector<2x128xi1>, vector<2x128xf32>
      %c1_59 = arith.constant 1 : index
      %c0_60 = arith.constant 0 : index
      %c0_61 = arith.constant 0 : index
      %87 = vector.load %arg6[%c1_59, %c0_60, %c0_61] : memref<3x128x128xf32, #tpu.memory_space<vmem>>, vector<1x128x128xf32>
      %88 = vector.shape_cast %87 : vector<1x128x128xf32> to vector<128x128xf32>
      %cst_62 = arith.constant dense<0.000000e+00> : vector<2x128xf32>
      %89 = tpu.matmul %86, %88, %cst_62 {dimension_numbers = #tpu.dot_dimension_numbers<[1], [0], [0], [1], [0, 0, 1, 1], [], []>} : vector<2x128xf32>, vector<128x128xf32>, vector<2x128xf32> -> vector<2x128xf32>
      %c3 = arith.constant 3 : index
      %c0_63 = arith.constant 0 : index
      %90 = vector.load %arg8[%c3, %c0_63] : memref<6x128xf32, #tpu.memory_space<vmem>>, vector<1x128xf32>
      %91 = vector.broadcast %90 : vector<1x128xf32> to vector<2x128xf32>
      %92 = arith.addf %89, %91 : vector<2x128xf32>
      %cst_64 = arith.constant 0.000000e+00 : f32
      %93 = vector.broadcast %cst_64 : f32 to vector<2x128xf32>
      %94 = arith.cmpf ogt, %92, %93 : vector<2x128xf32>
      %cst_65 = arith.constant 0.00999999977 : f32
      %95 = vector.broadcast %cst_65 : f32 to vector<2x128xf32>
      %96 = arith.mulf %95, %92 : vector<2x128xf32>
      %97 = arith.select %94, %92, %96 : vector<2x128xi1>, vector<2x128xf32>
      %c2_66 = arith.constant 2 : index
      %c0_67 = arith.constant 0 : index
      %c0_68 = arith.constant 0 : index
      %98 = vector.load %arg6[%c2_66, %c0_67, %c0_68] : memref<3x128x128xf32, #tpu.memory_space<vmem>>, vector<1x128x128xf32>
      %99 = vector.shape_cast %98 : vector<1x128x128xf32> to vector<128x128xf32>
      %cst_69 = arith.constant dense<0.000000e+00> : vector<2x128xf32>
      %100 = tpu.matmul %75, %99, %cst_69 {dimension_numbers = #tpu.dot_dimension_numbers<[1], [0], [0], [1], [0, 0, 1, 1], [], []>} : vector<2x128xf32>, vector<128x128xf32>, vector<2x128xf32> -> vector<2x128xf32>
      %c4 = arith.constant 4 : index
      %c0_70 = arith.constant 0 : index
      %101 = vector.load %arg8[%c4, %c0_70] : memref<6x128xf32, #tpu.memory_space<vmem>>, vector<1x128xf32>
      %102 = vector.broadcast %101 : vector<1x128xf32> to vector<2x128xf32>
      %103 = arith.addf %100, %102 : vector<2x128xf32>
      %cst_71 = arith.constant 0.000000e+00 : f32
      %104 = vector.broadcast %cst_71 : f32 to vector<2x128xf32>
      %105 = arith.maximumf %103, %104 : vector<2x128xf32>
      %c0_72 = arith.constant 0 : index
      %c0_73 = arith.constant 0 : index
      %106 = vector.load %arg7[%c0_72, %c0_73] : memref<256x128xf32, #tpu.memory_space<vmem>>, vector<128x128xf32>
      %cst_74 = arith.constant dense<0.000000e+00> : vector<2x128xf32>
      %107 = tpu.matmul %97, %106, %cst_74 {dimension_numbers = #tpu.dot_dimension_numbers<[1], [0], [0], [1], [0, 0, 1, 1], [], []>} : vector<2x128xf32>, vector<128x128xf32>, vector<2x128xf32> -> vector<2x128xf32>
      %c128_75 = arith.constant 128 : index
      %c0_76 = arith.constant 0 : index
      %108 = vector.load %arg7[%c128_75, %c0_76] : memref<256x128xf32, #tpu.memory_space<vmem>>, vector<128x128xf32>
      %cst_77 = arith.constant dense<0.000000e+00> : vector<2x128xf32>
      %109 = tpu.matmul %105, %108, %cst_77 {dimension_numbers = #tpu.dot_dimension_numbers<[1], [0], [0], [1], [0, 0, 1, 1], [], []>} : vector<2x128xf32>, vector<128x128xf32>, vector<2x128xf32> -> vector<2x128xf32>
      %110 = arith.addf %107, %109 : vector<2x128xf32>
      %c5 = arith.constant 5 : index
      %c0_78 = arith.constant 0 : index
      %111 = vector.load %arg8[%c5, %c0_78] : memref<6x128xf32, #tpu.memory_space<vmem>>, vector<1x128xf32>
      %112 = vector.broadcast %111 : vector<1x128xf32> to vector<2x128xf32>
      %113 = arith.addf %110, %112 : vector<2x128xf32>
      %c0_79 = arith.constant 0 : index
      %c0_80 = arith.constant 0 : index
      %114 = vector.load %arg9[%c0_79, %c0_80] : memref<2x128xf32, #tpu.memory_space<vmem>>, vector<2x128xf32>
      tpu.vector_store %arg9[%c0_79, %c0_80], %113 {strides = array<i32>} : memref<2x128xf32, #tpu.memory_space<vmem>>, vector<2x128xf32>,
    } else {
    }
    return
  }
  func.func @transform_0(%arg0: i32) -> (i32, i32) {
    %c0_i32 = arith.constant 0 : i32
    %c0_i32_0 = arith.constant 0 : i32
    return %c0_i32, %arg0 : i32, i32
  }
  func.func @transform_1(%arg0: i32) -> (i32, i32) {
    %c0_i32 = arith.constant 0 : i32
    %c0_i32_0 = arith.constant 0 : i32
    return %arg0, %c0_i32 : i32, i32
  }
  func.func @transform_2(%arg0: i32) -> (i32, i32) {
    %c0_i32 = arith.constant 0 : i32
    %c0_i32_0 = arith.constant 0 : i32
    return %arg0, %c0_i32 : i32, i32
  }
  func.func @transform_3(%arg0: i32) -> (i32, i32) {
    %c0_i32 = arith.constant 0 : i32
    %c0_i32_0 = arith.constant 0 : i32
    %c0_i32_1 = arith.constant 0 : i32
    return %c0_i32, %c0_i32_0 : i32, i32
  }
  func.func @transform_4(%arg0: i32) -> (i32, i32) {
    %c0_i32 = arith.constant 0 : i32
    %c0_i32_0 = arith.constant 0 : i32
    %c0_i32_1 = arith.constant 0 : i32
    return %c0_i32, %c0_i32_0 : i32, i32
  }
  func.func @transform_5(%arg0: i32) -> (i32, i32, i32) {
    %c0_i32 = arith.constant 0 : i32
    %c0_i32_0 = arith.constant 0 : i32
    %c0_i32_1 = arith.constant 0 : i32
    %c0_i32_2 = arith.constant 0 : i32
    return %c0_i32, %c0_i32_0, %c0_i32_1 : i32, i32, i32
  }
  func.func @transform_6(%arg0: i32) -> (i32, i32) {
    %c0_i32 = arith.constant 0 : i32
    %c0_i32_0 = arith.constant 0 : i32
    %c0_i32_1 = arith.constant 0 : i32
    return %c0_i32, %c0_i32_0 : i32, i32
  }
  func.func @transform_7(%arg0: i32) -> (i32, i32) {
    %c0_i32 = arith.constant 0 : i32
    %c0_i32_0 = arith.constant 0 : i32
    %c0_i32_1 = arith.constant 0 : i32
    return %c0_i32, %c0_i32_0 : i32, i32
  }
  func.func @transform_8(%arg0: i32) -> (i32, i32) {
    %c0_i32 = arith.constant 0 : i32
    %c0_i32_0 = arith.constant 0 : i32
    %c0_i32_1 = arith.constant 0 : i32
    return %c0_i32, %c0_i32_0 : i32, i32
  }
}

</mosaic_0001>

<llo_original>
// kernel: finetune_ende_forward.1
$region0: #{finetune_ende_forward.1}
  #allocation0 [shape = 'u32[]', space=smem, size = 0x4, offset = 0x4, fixed_abs, tag = 'smem constant byte address 0x4 - core index']
  #allocation1 [shape = 'u32[72,128]{1,0:T(1,128)}', space=vmem, size = 0x9000, scoped, tag = 'internal scratch']
  #allocation2 [shape = 'f32[2,64]{1,0:T(2,128)}', space=vmem, size = 0x400, scoped, tag = 'scratch operand']
  #allocation3 [shape = 'f32[2,1]{1,0:T(2,128)}', space=vmem, size = 0x400, scoped, tag = 'scratch operand']
  #allocation4 [shape = 'f32[2,64]{1,0:T(2,128)}', space=vmem, size = 0x400, scoped, tag = 'scratch operand']
  %s0 = inlined_call_operand.vmem [shape: s32[1,128], index: 0, kind: input, shape index: {}]
  %s1 = inlined_call_operand.vmem [shape: s32[128,1], index: 1, kind: input, shape index: {}]
  %s2 = inlined_call_operand.vmem [shape: f32[128,64], index: 2, kind: input, shape index: {}]
  %s3 = inlined_call_operand.vmem [shape: f32[2,16], index: 3, kind: input, shape index: {}]
  %s4 = inlined_call_operand.vmem [shape: f32[144,256], index: 4, kind: input, shape index: {}]
  %s5 = inlined_call_operand.vmem [shape: f32[3,128,128], index: 5, kind: input, shape index: {}]
  %s6 = inlined_call_operand.vmem [shape: f32[256,128], index: 6, kind: input, shape index: {}]
  %s7 = inlined_call_operand.vmem [shape: f32[6,128], index: 7, kind: input, shape index: {}]
  %s8 = inlined_call_operand.vmem [shape: f32[2,128], index: 8, kind: output, shape index: {}]
  %s9 = sld [smem:[#allocation0]]
  $region50: #{finetune_ende_forward.1} parent=0
    _
  %s11 = ssub.s32 1, %s9
  %s12 = scalar_select 0, %s11, %s9
  // Predicated region
  $region2: #{finetune_ende_forward.1} parent=0 // pred_check
    _
  $region3: #{finetune_ende_forward.1} parent=0 // pred_check_branch
    %14 = sbr.rel (0) target = $region5
  $region4: #{finetune_ende_forward.1} parent=0 // pred_region
    _
  $region5: #{finetune_ende_forward.1} parent=0 // pred_fallthru
    _
  // Predicated region
  $region6: #{finetune_ende_forward.1} parent=0 // pred_check
    _
  $region7: #{finetune_ende_forward.1} parent=0 // pred_check_branch
    %16 = sbr.rel (0) target = $region9
  $region8: #{finetune_ende_forward.1} parent=0 // pred_region
    _
  $region9: #{finetune_ende_forward.1} parent=0 // pred_fallthru
    _
  // Predicated region
  $region10: #{finetune_ende_forward.1} parent=0 // pred_check
    _
  $region11: #{finetune_ende_forward.1} parent=0 // pred_check_branch
    %18 = sbr.rel (0) target = $region13
  $region12: #{finetune_ende_forward.1} parent=0 // pred_region
    _
  $region13: #{finetune_ende_forward.1} parent=0 // pred_fallthru
    _
  // Predicated region
  $region14: #{finetune_ende_forward.1} parent=0 // pred_check
    _
  $region15: #{finetune_ende_forward.1} parent=0 // pred_check_branch
    %20 = sbr.rel (0) target = $region17
  $region16: #{finetune_ende_forward.1} parent=0 // pred_region
    _
  $region17: #{finetune_ende_forward.1} parent=0 // pred_fallthru
    _
  // Predicated region
  $region18: #{finetune_ende_forward.1} parent=0 // pred_check
    _
  $region19: #{finetune_ende_forward.1} parent=0 // pred_check_branch
    %22 = sbr.rel (0) target = $region21
  $region20: #{finetune_ende_forward.1} parent=0 // pred_region
    _
  $region21: #{finetune_ende_forward.1} parent=0 // pred_fallthru
    _
  // Predicated region
  $region22: #{finetune_ende_forward.1} parent=0 // pred_check
    _
  $region23: #{finetune_ende_forward.1} parent=0 // pred_check_branch
    %24 = sbr.rel (0) target = $region25
  $region24: #{finetune_ende_forward.1} parent=0 // pred_region
    _
  $region25: #{finetune_ende_forward.1} parent=0 // pred_fallthru
    _
  // Predicated region
  $region26: #{finetune_ende_forward.1} parent=0 // pred_check
    _
  $region27: #{finetune_ende_forward.1} parent=0 // pred_check_branch
    %26 = sbr.rel (0) target = $region29
  $region28: #{finetune_ende_forward.1} parent=0 // pred_region
    _
  $region29: #{finetune_ende_forward.1} parent=0 // pred_fallthru
    _
  // Predicated region
  $region30: #{finetune_ende_forward.1} parent=0 // pred_check
    _
  $region31: #{finetune_ende_forward.1} parent=0 // pred_check_branch
    %28 = sbr.rel (0) target = $region33
  $region32: #{finetune_ende_forward.1} parent=0 // pred_region
    _
  $region33: #{finetune_ende_forward.1} parent=0 // pred_fallthru
    _
  %p29 = scmp.eq.s32.totalorder 0, 0
  // Predicated region
  $region34: #{finetune_ende_forward.1} parent=0 // pred_check
    %p30 = pneg %p29
  $region35: #{finetune_ende_forward.1} parent=0 // pred_check_branch
    %32 = sbr.rel (%p30) target = $region37
  $region36: #{finetune_ende_forward.1} parent=0 // pred_region
    %vm33 = vcmask 517120
    %34 = vst.msk [vmem:[#allocation2] sm:$0x3] %vm33, 0.0
    %vm35 = vcmask 1024
    %36 = vst.msk [vmem:[#allocation3] sm:$0x3] %vm35, 0.0
    %37 = vst.msk [vmem:[#allocation4] sm:$0x3] %vm33, -3.4028235e+38
  $region37: #{finetune_ende_forward.1} parent=0 // pred_fallthru
    _
  %v38 = vld [vmem:[%s2] sm:$0xff]
  %v39 = vld [vmem:[%s2 + $0x8] sm:$0xff]
  %v40 = vld [vmem:[%s2 + $0x10] sm:$0xff]
  %v41 = vld [vmem:[%s2 + $0x18] sm:$0xff]
  %v42 = vld [vmem:[%s2 + $0x20] sm:$0xff]
  %v43 = vld [vmem:[%s2 + $0x28] sm:$0xff]
  %v44 = vld [vmem:[%s2 + $0x30] sm:$0xff]
  %v45 = vld [vmem:[%s2 + $0x38] sm:$0xff]
  %v46 = vld [vmem:[%s2 + $0x40] sm:$0xff]
  %v47 = vld [vmem:[%s2 + $0x48] sm:$0xff]
  %v48 = vld [vmem:[%s2 + $0x50] sm:$0xff]
  %v49 = vld [vmem:[%s2 + $0x58] sm:$0xff]
  %v50 = vld [vmem:[%s2 + $0x60] sm:$0xff]
  %v51 = vld [vmem:[%s2 + $0x68] sm:$0xff]
  %v52 = vld [vmem:[%s2 + $0x70] sm:$0xff]
  %v53 = vld [vmem:[%s2 + $0x78] sm:$0xff]
  %v54 = vld [vmem:[%s0] sm:$0x1]
  %v55 = vld [vmem:[%s1] sm:$0xff]
  %v56 = vld [vmem:[%s1 + $0x8] sm:$0xff]
  %v57 = vld [vmem:[%s1 + $0x10] sm:$0xff]
  %v58 = vld [vmem:[%s1 + $0x18] sm:$0xff]
  %v59 = vld [vmem:[%s1 + $0x20] sm:$0xff]
  %v60 = vld [vmem:[%s1 + $0x28] sm:$0xff]
  %v61 = vld [vmem:[%s1 + $0x30] sm:$0xff]
  %v62 = vld [vmem:[%s1 + $0x38] sm:$0xff]
  %v63 = vld [vmem:[%s1 + $0x40] sm:$0xff]
  %v64 = vld [vmem:[%s1 + $0x48] sm:$0xff]
  %v65 = vld [vmem:[%s1 + $0x50] sm:$0xff]
  %v66 = vld [vmem:[%s1 + $0x58] sm:$0xff]
  %v67 = vld [vmem:[%s1 + $0x60] sm:$0xff]
  %v68 = vld [vmem:[%s1 + $0x68] sm:$0xff]
  %v69 = vld [vmem:[%s1 + $0x70] sm:$0xff]
  %v70 = vld [vmem:[%s1 + $0x78] sm:$0xff]
  %v71 = vlaneseq
  %v72 = vshrl.u32 %v71, 7
  %v73 = vperm.slane %v54, 0
  %vm74 = vcmp.eq.s32.totalorder %v72, %v73
  %v75 = vsel %vm74, 1, 0
  %v76 = vcvt.s32.f32 %v75
  %v77 = vld [vmem:[#allocation2] sm:$0x3]
  %78 = vmatpush.msra.mxu0 %v53
  %79 = vmatpush.msra.mxu0 %v52
  %80 = vmatpush.msra.mxu0 %v51
  %81 = vmatpush.msra.mxu0 %v50
  %82 = vmatpush.msra.mxu0 %v49
  %83 = vmatpush.msra.mxu0 %v48
  %84 = vmatpush.msra.mxu0 %v47
  %85 = vmatpush.msra.mxu0 %v46
  %86 = vmatpush.msra.mxu0 %v45
  %87 = vmatpush.msra.mxu0 %v44
  %88 = vmatpush.msra.mxu0 %v43
  %89 = vmatpush.msra.mxu0 %v42
  %90 = vmatpush.msra.mxu0 %v41
  %91 = vmatpush.msra.mxu0 %v40
  %92 = vmatpush.msra.mxu0 %v39
  %93 = vmatpush.msra.mxu0 %v38
  %94 = vmatmul.f32.gmra.mxu0 %v76
  %v95 = vpop.f32.mrf.mxu0
  %v96 = vadd.f32 0.0, %v95
  %97 = vdwg.mxu0
  %v98 = vadd.f32 %v77, %v96
  %vm99 = vcmask 517120
  %100 = vst.msk [vmem:[#allocation2] sm:$0x3] %vm99, %v98
  %v101 = vld [vmem:[#allocation3] sm:$0x3]
  %vm102 = vcmask 1041408
  %v103 = vsel %vm102, %v76, 0.0
  %104 = vadd.xlane.f32.xlu0 %v103
  %v105 = vpop.xlane.xlu0 %104
  %v106 = vadd.f32 %v101, %v105
  %vm107 = vcmask 1024
  %108 = vst.msk [vmem:[#allocation3] sm:$0x3] %vm107, %v106
  %vm109 = vcmp.eq.s32.totalorder %v55, 0
  %vm110 = vcmp.eq.s32.totalorder %v56, 0
  %vm111 = vcmp.eq.s32.totalorder %v57, 0
  %vm112 = vcmp.eq.s32.totalorder %v58, 0
  %vm113 = vcmp.eq.s32.totalorder %v59, 0
  %vm114 = vcmp.eq.s32.totalorder %v60, 0
  %vm115 = vcmp.eq.s32.totalorder %v61, 0
  %vm116 = vcmp.eq.s32.totalorder %v62, 0
  %vm117 = vcmp.eq.s32.totalorder %v63, 0
  %vm118 = vcmp.eq.s32.totalorder %v64, 0
  %vm119 = vcmp.eq.s32.totalorder %v65, 0
  %vm120 = vcmp.eq.s32.totalorder %v66, 0
  %vm121 = vcmp.eq.s32.totalorder %v67, 0
  %vm122 = vcmp.eq.s32.totalorder %v68, 0
  %vm123 = vcmp.eq.s32.totalorder %v69, 0
  %vm124 = vcmp.eq.s32.totalorder %v70, 0
  %v125 = vsel %vm109, 1, 0
  %v126 = vsel %vm110, 1, 0
  %v127 = vsel %vm111, 1, 0
  %v128 = vsel %vm112, 1, 0
  %v129 = vsel %vm113, 1, 0
  %v130 = vsel %vm114, 1, 0
  %v131 = vsel %vm115, 1, 0
  %v132 = vsel %vm116, 1, 0
  %v133 = vsel %vm117, 1, 0
  %v134 = vsel %vm118, 1, 0
  %v135 = vsel %vm119, 1, 0
  %v136 = vsel %vm120, 1, 0
  %v137 = vsel %vm121, 1, 0
  %v138 = vsel %vm122, 1, 0
  %v139 = vsel %vm123, 1, 0
  %v140 = vsel %vm124, 1, 0
  %141 = vset.pattern.permute.xlu0 0
  %142 = vperm.xlu0 %141, %v125
  %v143 = vpop.permute.xlu0 %142
  %144 = vset.pattern.permute.xlu0 0
  %145 = vperm.xlu0 %144, %v126
  %v146 = vpop.permute.xlu0 %145
  %147 = vset.pattern.permute.xlu0 0
  %148 = vperm.xlu0 %147, %v127
  %v149 = vpop.permute.xlu0 %148
  %150 = vset.pattern.permute.xlu0 0
  %151 = vperm.xlu0 %150, %v128
  %v152 = vpop.permute.xlu0 %151
  %153 = vset.pattern.permute.xlu0 0
  %154 = vperm.xlu0 %153, %v129
  %v155 = vpop.permute.xlu0 %154
  %156 = vset.pattern.permute.xlu0 0
  %157 = vperm.xlu0 %156, %v130
  %v158 = vpop.permute.xlu0 %157
  %159 = vset.pattern.permute.xlu0 0
  %160 = vperm.xlu0 %159, %v131
  %v161 = vpop.permute.xlu0 %160
  %162 = vset.pattern.permute.xlu0 0
  %163 = vperm.xlu0 %162, %v132
  %v164 = vpop.permute.xlu0 %163
  %165 = vset.pattern.permute.xlu0 0
  %166 = vperm.xlu0 %165, %v133
  %v167 = vpop.permute.xlu0 %166
  %168 = vset.pattern.permute.xlu0 0
  %169 = vperm.xlu0 %168, %v134
  %v170 = vpop.permute.xlu0 %169
  %171 = vset.pattern.permute.xlu0 0
  %172 = vperm.xlu0 %171, %v135
  %v173 = vpop.permute.xlu0 %172
  %174 = vset.pattern.permute.xlu0 0
  %175 = vperm.xlu0 %174, %v136
  %v176 = vpop.permute.xlu0 %175
  %177 = vset.pattern.permute.xlu0 0
  %178 = vperm.xlu0 %177, %v137
  %v179 = vpop.permute.xlu0 %178
  %180 = vset.pattern.permute.xlu0 0
  %181 = vperm.xlu0 %180, %v138
  %v182 = vpop.permute.xlu0 %181
  %183 = vset.pattern.permute.xlu0 0
  %184 = vperm.xlu0 %183, %v139
  %v185 = vpop.permute.xlu0 %184
  %186 = vset.pattern.permute.xlu0 0
  %187 = vperm.xlu0 %186, %v140
  %v188 = vpop.permute.xlu0 %187
  %vm189 = vcmp.eq.s32.totalorder %v143, 1
  %vm190 = vcmp.eq.s32.totalorder %v146, 1
  %vm191 = vcmp.eq.s32.totalorder %v149, 1
  %vm192 = vcmp.eq.s32.totalorder %v152, 1
  %vm193 = vcmp.eq.s32.totalorder %v155, 1
  %vm194 = vcmp.eq.s32.totalorder %v158, 1
  %vm195 = vcmp.eq.s32.totalorder %v161, 1
  %vm196 = vcmp.eq.s32.totalorder %v164, 1
  %vm197 = vcmp.eq.s32.totalorder %v167, 1
  %vm198 = vcmp.eq.s32.totalorder %v170, 1
  %vm199 = vcmp.eq.s32.totalorder %v173, 1
  %vm200 = vcmp.eq.s32.totalorder %v176, 1
  %vm201 = vcmp.eq.s32.totalorder %v179, 1
  %vm202 = vcmp.eq.s32.totalorder %v182, 1
  %vm203 = vcmp.eq.s32.totalorder %v185, 1
  %vm204 = vcmp.eq.s32.totalorder %v188, 1
  %v205 = vsel %vm189, %v38, -3.4028235e+38
  %v206 = vsel %vm190, %v39, -3.4028235e+38
  %v207 = vsel %vm191, %v40, -3.4028235e+38
  %v208 = vsel %vm192, %v41, -3.4028235e+38
  %v209 = vsel %vm193, %v42, -3.4028235e+38
  %v210 = vsel %vm194, %v43, -3.4028235e+38
  %v211 = vsel %vm195, %v44, -3.4028235e+38
  %v212 = vsel %vm196, %v45, -3.4028235e+38
  %v213 = vsel %vm197, %v46, -3.4028235e+38
  %v214 = vsel %vm198, %v47, -3.4028235e+38
  %v215 = vsel %vm199, %v48, -3.4028235e+38
  %v216 = vsel %vm200, %v49, -3.4028235e+38
  %v217 = vsel %vm201, %v50, -3.4028235e+38
  %v218 = vsel %vm202, %v51, -3.4028235e+38
  %v219 = vsel %vm203, %v52, -3.4028235e+38
  %v220 = vsel %vm204, %v53, -3.4028235e+38
  %v221 = vld [vmem:[#allocation4] sm:$0x1]
  %vm222 = vcmask 523264
  %v223 = vsel %vm222, %v205, -inf
  %v224 = vsel %vm222, %v206, -inf
  %v225 = vsel %vm222, %v207, -inf
  %v226 = vsel %vm222, %v208, -inf
  %v227 = vsel %vm222, %v209, -inf
  %v228 = vmax.f32 %v223, %v227
  %v229 = vsel %vm222, %v210, -inf
  %v230 = vmax.f32 %v224, %v229
  %v231 = vsel %vm222, %v211, -inf
  %v232 = vmax.f32 %v225, %v231
  %v233 = vsel %vm222, %v212, -inf
  %v234 = vmax.f32 %v226, %v233
  %v235 = vsel %vm222, %v213, -inf
  %v236 = vmax.f32 %v228, %v235
  %v237 = vsel %vm222, %v214, -inf
  %v238 = vmax.f32 %v230, %v237
  %v239 = vsel %vm222, %v215, -inf
  %v240 = vmax.f32 %v232, %v239
  %v241 = vsel %vm222, %v216, -inf
  %v242 = vmax.f32 %v234, %v241
  %v243 = vsel %vm222, %v217, -inf
  %v244 = vmax.f32 %v236, %v243
  %v245 = vsel %vm222, %v218, -inf
  %v246 = vmax.f32 %v238, %v245
  %v247 = vsel %vm222, %v219, -inf
  %v248 = vmax.f32 %v240, %v247
  %v249 = vsel %vm222, %v220, -inf
  %v250 = vmax.f32 %v242, %v249
  %v251 = vmax.f32 %v244, %v246
  %v252 = vmax.f32 %v248, %v250
  %v253 = vmax.f32 %v251, %v252
  %v254 = vrot.slane %v253, 4
  %v255 = vmax.f32 %v253, %v254
  %v256 = vrot.slane %v255, 2
  %v257 = vmax.f32 %v255, %v256
  %v258 = vrot.slane %v257, 1
  %v259 = vmax.f32 %v257, %v258
  %v260 = vmax.f32 %v221, %v259
  %vm261 = vcmask 516096
  %262 = vst.msk [vmem:[#allocation4] sm:$0x1] %vm261, %v260
  %vm263 = vcmp.eq.s32.totalorder %v55, 1
  %vm264 = vcmp.eq.s32.totalorder %v56, 1
  %vm265 = vcmp.eq.s32.totalorder %v57, 1
  %vm266 = vcmp.eq.s32.totalorder %v58, 1
  %vm267 = vcmp.eq.s32.totalorder %v59, 1
  %vm268 = vcmp.eq.s32.totalorder %v60, 1
  %vm269 = vcmp.eq.s32.totalorder %v61, 1
  %vm270 = vcmp.eq.s32.totalorder %v62, 1
  %vm271 = vcmp.eq.s32.totalorder %v63, 1
  %vm272 = vcmp.eq.s32.totalorder %v64, 1
  %vm273 = vcmp.eq.s32.totalorder %v65, 1
  %vm274 = vcmp.eq.s32.totalorder %v66, 1
  %vm275 = vcmp.eq.s32.totalorder %v67, 1
  %vm276 = vcmp.eq.s32.totalorder %v68, 1
  %vm277 = vcmp.eq.s32.totalorder %v69, 1
  %vm278 = vcmp.eq.s32.totalorder %v70, 1
  %v279 = vsel %vm263, 1, 0
  %v280 = vsel %vm264, 1, 0
  %v281 = vsel %vm265, 1, 0
  %v282 = vsel %vm266, 1, 0
  %v283 = vsel %vm267, 1, 0
  %v284 = vsel %vm268, 1, 0
  %v285 = vsel %vm269, 1, 0
  %v286 = vsel %vm270, 1, 0
  %v287 = vsel %vm271, 1, 0
  %v288 = vsel %vm272, 1, 0
  %v289 = vsel %vm273, 1, 0
  %v290 = vsel %vm274, 1, 0
  %v291 = vsel %vm275, 1, 0
  %v292 = vsel %vm276, 1, 0
  %v293 = vsel %vm277, 1, 0
  %v294 = vsel %vm278, 1, 0
  %295 = vset.pattern.permute.xlu0 0
  %296 = vperm.xlu0 %295, %v279
  %v297 = vpop.permute.xlu0 %296
  %298 = vset.pattern.permute.xlu0 0
  %299 = vperm.xlu0 %298, %v280
  %v300 = vpop.permute.xlu0 %299
  %301 = vset.pattern.permute.xlu0 0
  %302 = vperm.xlu0 %301, %v281
  %v303 = vpop.permute.xlu0 %302
  %304 = vset.pattern.permute.xlu0 0
  %305 = vperm.xlu0 %304, %v282
  %v306 = vpop.permute.xlu0 %305
  %307 = vset.pattern.permute.xlu0 0
  %308 = vperm.xlu0 %307, %v283
  %v309 = vpop.permute.xlu0 %308
  %310 = vset.pattern.permute.xlu0 0
  %311 = vperm.xlu0 %310, %v284
  %v312 = vpop.permute.xlu0 %311
  %313 = vset.pattern.permute.xlu0 0
  %314 = vperm.xlu0 %313, %v285
  %v315 = vpop.permute.xlu0 %314
  %316 = vset.pattern.permute.xlu0 0
  %317 = vperm.xlu0 %316, %v286
  %v318 = vpop.permute.xlu0 %317
  %319 = vset.pattern.permute.xlu0 0
  %320 = vperm.xlu0 %319, %v287
  %v321 = vpop.permute.xlu0 %320
  %322 = vset.pattern.permute.xlu0 0
  %323 = vperm.xlu0 %322, %v288
  %v324 = vpop.permute.xlu0 %323
  %325 = vset.pattern.permute.xlu0 0
  %326 = vperm.xlu0 %325, %v289
  %v327 = vpop.permute.xlu0 %326
  %328 = vset.pattern.permute.xlu0 0
  %329 = vperm.xlu0 %328, %v290
  %v330 = vpop.permute.xlu0 %329
  %331 = vset.pattern.permute.xlu0 0
  %332 = vperm.xlu0 %331, %v291
  %v333 = vpop.permute.xlu0 %332
  %334 = vset.pattern.permute.xlu0 0
  %335 = vperm.xlu0 %334, %v292
  %v336 = vpop.permute.xlu0 %335
  %337 = vset.pattern.permute.xlu0 0
  %338 = vperm.xlu0 %337, %v293
  %v339 = vpop.permute.xlu0 %338
  %340 = vset.pattern.permute.xlu0 0
  %341 = vperm.xlu0 %340, %v294
  %v342 = vpop.permute.xlu0 %341
  %vm343 = vcmp.eq.s32.totalorder %v297, 1
  %vm344 = vcmp.eq.s32.totalorder %v300, 1
  %vm345 = vcmp.eq.s32.totalorder %v303, 1
  %vm346 = vcmp.eq.s32.totalorder %v306, 1
  %vm347 = vcmp.eq.s32.totalorder %v309, 1
  %vm348 = vcmp.eq.s32.totalorder %v312, 1
  %vm349 = vcmp.eq.s32.totalorder %v315, 1
  %vm350 = vcmp.eq.s32.totalorder %v318, 1
  %vm351 = vcmp.eq.s32.totalorder %v321, 1
  %vm352 = vcmp.eq.s32.totalorder %v324, 1
  %vm353 = vcmp.eq.s32.totalorder %v327, 1
  %vm354 = vcmp.eq.s32.totalorder %v330, 1
  %vm355 = vcmp.eq.s32.totalorder %v333, 1
  %vm356 = vcmp.eq.s32.totalorder %v336, 1
  %vm357 = vcmp.eq.s32.totalorder %v339, 1
  %vm358 = vcmp.eq.s32.totalorder %v342, 1
  %v359 = vsel %vm343, %v38, -3.4028235e+38
  %v360 = vsel %vm344, %v39, -3.4028235e+38
  %v361 = vsel %vm345, %v40, -3.4028235e+38
  %v362 = vsel %vm346, %v41, -3.4028235e+38
  %v363 = vsel %vm347, %v42, -3.4028235e+38
  %v364 = vsel %vm348, %v43, -3.4028235e+38
  %v365 = vsel %vm349, %v44, -3.4028235e+38
  %v366 = vsel %vm350, %v45, -3.4028235e+38
  %v367 = vsel %vm351, %v46, -3.4028235e+38
  %v368 = vsel %vm352, %v47, -3.4028235e+38
  %v369 = vsel %vm353, %v48, -3.4028235e+38
  %v370 = vsel %vm354, %v49, -3.4028235e+38
  %v371 = vsel %vm355, %v50, -3.4028235e+38
  %v372 = vsel %vm356, %v51, -3.4028235e+38
  %v373 = vsel %vm357, %v52, -3.4028235e+38
  %v374 = vsel %vm358, %v53, -3.4028235e+38
  %v375 = vld [vmem:[#allocation4 + $0x1] sm:$0x1]
  %v376 = vsel %vm222, %v359, -inf
  %v377 = vsel %vm222, %v360, -inf
  %v378 = vsel %vm222, %v361, -inf
  %v379 = vsel %vm222, %v362, -inf
  %v380 = vsel %vm222, %v363, -inf
  %v381 = vmax.f32 %v376, %v380
  %v382 = vsel %vm222, %v364, -inf
  %v383 = vmax.f32 %v377, %v382
  %v384 = vsel %vm222, %v365, -inf
  %v385 = vmax.f32 %v378, %v384
  %v386 = vsel %vm222, %v366, -inf
  %v387 = vmax.f32 %v379, %v386
  %v388 = vsel %vm222, %v367, -inf
  %v389 = vmax.f32 %v381, %v388
  %v390 = vsel %vm222, %v368, -inf
  %v391 = vmax.f32 %v383, %v390
  %v392 = vsel %vm222, %v369, -inf
  %v393 = vmax.f32 %v385, %v392
  %v394 = vsel %vm222, %v370, -inf
  %v395 = vmax.f32 %v387, %v394
  %v396 = vsel %vm222, %v371, -inf
  %v397 = vmax.f32 %v389, %v396
  %v398 = vsel %vm222, %v372, -inf
  %v399 = vmax.f32 %v391, %v398
  %v400 = vsel %vm222, %v373, -inf
  %v401 = vmax.f32 %v393, %v400
  %v402 = vsel %vm222, %v374, -inf
  %v403 = vmax.f32 %v395, %v402
  %v404 = vmax.f32 %v397, %v399
  %v405 = vmax.f32 %v401, %v403
  %v406 = vmax.f32 %v404, %v405
  %v407 = vrot.slane %v406, 4
  %v408 = vmax.f32 %v406, %v407
  %v409 = vrot.slane %v408, 2
  %v410 = vmax.f32 %v408, %v409
  %v411 = vrot.slane %v410, 1
  %v412 = vmax.f32 %v410, %v411
  %v413 = vmax.f32 %v375, %v412
  %414 = vst.msk [vmem:[#allocation4 + $0x1] sm:$0x1] %vm261, %v413
  // Predicated region
  $region38: #{finetune_ende_forward.1} parent=0 // pred_check
    %p415 = pneg %p29
  $region39: #{finetune_ende_forward.1} parent=0 // pred_check_branch
    %417 = sbr.rel (%p415) target = $region41
  $region40: #{finetune_ende_forward.1} parent=0 // pred_region
    %v418 = vld [vmem:[#allocation2] sm:$0x3]
    %v419 = vld [vmem:[#allocation3] sm:$0x3]
    %v420 = vmax.f32 %v419, 1.0
    %422 = vset.pattern.permute.xlu0 0
    %423 = vperm.xlu0 %422, %v420
    %v424 = vpop.permute.xlu0 %423
    %v426 = vrcp.pop %v424
    %v427 = vmul.f32 %v424, %v426
    %v428 = vsub.f32 1.0, %v427
    %v429 = vmul.f32 %v426, %v428
    %v430 = vadd.f32 %v426, %v429
    %vm431 = vweird.f32 %v424
    %vm432 = vweird.f32 %v426
    %vm433 = vmor %vm431, %vm432
    %v434 = vsel %vm433, %v426, %v430
    %v435 = vand.u32 2147483647, %v424
    %vm436 = vcmp.eq.f32.partialorder %v435, 8.507059e+37
    %v437 = vand.u32 %v424, 2147483648
    %v438 = vor.u32 1.1754944e-38, %v437
    %v439 = vsel %vm436, %v438, %v434
    %v440 = vmul.f32 %v418, %v439
    %v441 = vld [vmem:[#allocation4] sm:$0x3]
    %v442 = vld [vmem:[%s3] sm:$0x3]
    %v443 = vld [vmem:[%s4] sm:$0xff]
    %v444 = vld [vmem:[%s4 + $0x8] sm:$0xff]
    %v445 = vld [vmem:[%s4 + $0x10] sm:$0xff]
    %v446 = vld [vmem:[%s4 + $0x18] sm:$0xff]
    %v447 = vld [vmem:[%s4 + $0x20] sm:$0xff]
    %v448 = vld [vmem:[%s4 + $0x28] sm:$0xff]
    %v449 = vld [vmem:[%s4 + $0x30] sm:$0xff]
    %v450 = vld [vmem:[%s4 + $0x38] sm:$0xff]
    %v451 = vld [vmem:[%s4 + $0x40] sm:$0xff]
    %v452 = vld [vmem:[%s4 + $0x48] sm:$0xff]
    %v453 = vld [vmem:[%s4 + $0x50] sm:$0xff]
    %v454 = vld [vmem:[%s4 + $0x58] sm:$0xff]
    %v455 = vld [vmem:[%s4 + $0x60] sm:$0xff]
    %v456 = vld [vmem:[%s4 + $0x68] sm:$0xff]
    %v457 = vld [vmem:[%s4 + $0x70] sm:$0xff]
    %v458 = vld [vmem:[%s4 + $0x78] sm:$0xff]
    %v459 = vld [vmem:[%s4 + $0x80] sm:$0xff]
    %v460 = vld [vmem:[%s4 + $0x88] sm:$0xff]
    %v461 = vld [vmem:[%s4 + $0x90] sm:$0xff]
    %v462 = vld [vmem:[%s4 + $0x98] sm:$0xff]
    %v463 = vld [vmem:[%s4 + $0xa0] sm:$0xff]
    %v464 = vld [vmem:[%s4 + $0xa8] sm:$0xff]
    %v465 = vld [vmem:[%s4 + $0xb0] sm:$0xff]
    %v466 = vld [vmem:[%s4 + $0xb8] sm:$0xff]
    %v467 = vld [vmem:[%s4 + $0xc0] sm:$0xff]
    %v468 = vld [vmem:[%s4 + $0xc8] sm:$0xff]
    %v469 = vld [vmem:[%s4 + $0xd0] sm:$0xff]
    %v470 = vld [vmem:[%s4 + $0xd8] sm:$0xff]
    %v471 = vld [vmem:[%s4 + $0xe0] sm:$0xff]
    %v472 = vld [vmem:[%s4 + $0xe8] sm:$0xff]
    %v473 = vld [vmem:[%s4 + $0xf0] sm:$0xff]
    %v474 = vld [vmem:[%s4 + $0xf8] sm:$0xff]
    %v476 = vsel %vm222, %v441, 0
    %478 = vmatpush.msra.mxu0 0.0
    %479 = vmatpush.msra.mxu0 0.0
    %480 = vmatpush.msra.mxu0 0.0
    %481 = vmatpush.msra.mxu0 0.0
    %482 = vmatpush.msra.mxu0 0.0
    %483 = vmatpush.msra.mxu0 0.0
    %484 = vmatpush.msra.mxu0 0.0
    %485 = vmatpush.msra.mxu0 0.0
    %486 = vmatpush.msra.mxu0 %v473
    %487 = vmatpush.msra.mxu0 %v471
    %488 = vmatpush.msra.mxu0 %v469
    %489 = vmatpush.msra.mxu0 %v467
    %490 = vmatpush.msra.mxu0 %v465
    %491 = vmatpush.msra.mxu0 %v463
    %492 = vmatpush.msra.mxu0 %v461
    %493 = vmatpush.msra.mxu0 %v459
    %494 = vmatmul.f32.gmra.mxu0 %v476
    %v495 = vpop.f32.mrf.mxu0
    %v496 = vadd.f32 0.0, %v495
    %497 = vdwg.mxu0
    %498 = vmatpush.msra.mxu0 0.0
    %499 = vmatpush.msra.mxu0 0.0
    %500 = vmatpush.msra.mxu0 0.0
    %501 = vmatpush.msra.mxu0 0.0
    %502 = vmatpush.msra.mxu0 0.0
    %503 = vmatpush.msra.mxu0 0.0
    %504 = vmatpush.msra.mxu0 0.0
    %505 = vmatpush.msra.mxu0 0.0
    %506 = vmatpush.msra.mxu0 %v474
    %507 = vmatpush.msra.mxu0 %v472
    %508 = vmatpush.msra.mxu0 %v470
    %509 = vmatpush.msra.mxu0 %v468
    %510 = vmatpush.msra.mxu0 %v466
    %511 = vmatpush.msra.mxu0 %v464
    %512 = vmatpush.msra.mxu0 %v462
    %513 = vmatpush.msra.mxu0 %v460
    %514 = vmatmul.f32.gmra.mxu0 %v476
    %v515 = vpop.f32.mrf.mxu0
    %v516 = vadd.f32 0.0, %v515
    %517 = vdwg.mxu0
    %v519 = vsel %vm222, %v440, 0
    %521 = vmatpush.msra.mxu0 0.0
    %522 = vmatpush.msra.mxu0 0.0
    %523 = vmatpush.msra.mxu0 0.0
    %524 = vmatpush.msra.mxu0 0.0
    %525 = vmatpush.msra.mxu0 0.0
    %526 = vmatpush.msra.mxu0 0.0
    %527 = vmatpush.msra.mxu0 0.0
    %528 = vmatpush.msra.mxu0 0.0
    %529 = vmatpush.msra.mxu0 %v457
    %530 = vmatpush.msra.mxu0 %v455
    %531 = vmatpush.msra.mxu0 %v453
    %532 = vmatpush.msra.mxu0 %v451
    %533 = vmatpush.msra.mxu0 %v449
    %534 = vmatpush.msra.mxu0 %v447
    %535 = vmatpush.msra.mxu0 %v445
    %536 = vmatpush.msra.mxu0 %v443
    %537 = vmatmul.f32.gmra.mxu0 %v519
    %v538 = vpop.f32.mrf.mxu0
    %v539 = vadd.f32 %v496, %v538
    %540 = vdwg.mxu0
    %541 = vmatpush.msra.mxu0 0.0
    %542 = vmatpush.msra.mxu0 0.0
    %543 = vmatpush.msra.mxu0 0.0
    %544 = vmatpush.msra.mxu0 0.0
    %545 = vmatpush.msra.mxu0 0.0
    %546 = vmatpush.msra.mxu0 0.0
    %547 = vmatpush.msra.mxu0 0.0
    %548 = vmatpush.msra.mxu0 0.0
    %549 = vmatpush.msra.mxu0 %v458
    %550 = vmatpush.msra.mxu0 %v456
    %551 = vmatpush.msra.mxu0 %v454
    %552 = vmatpush.msra.mxu0 %v452
    %553 = vmatpush.msra.mxu0 %v450
    %554 = vmatpush.msra.mxu0 %v448
    %555 = vmatpush.msra.mxu0 %v446
    %556 = vmatpush.msra.mxu0 %v444
    %557 = vmatmul.f32.gmra.mxu0 %v519
    %v558 = vpop.f32.mrf.mxu0
    %v559 = vadd.f32 %v516, %v558
    %560 = vdwg.mxu0
    %v561 = vld [vmem:[%s4 + $0x100] sm:$0xff]
    %v562 = vld [vmem:[%s4 + $0x108] sm:$0xff]
    %v563 = vld [vmem:[%s4 + $0x110] sm:$0xff]
    %v564 = vld [vmem:[%s4 + $0x118] sm:$0xff]
    %vm565 = vcmask 130048
    %v567 = vsel %vm565, %v442, 0
    %569 = vmatpush.msra.mxu0 0.0
    %570 = vmatpush.msra.mxu0 0.0
    %571 = vmatpush.msra.mxu0 0.0
    %572 = vmatpush.msra.mxu0 0.0
    %573 = vmatpush.msra.mxu0 0.0
    %574 = vmatpush.msra.mxu0 0.0
    %575 = vmatpush.msra.mxu0 0.0
    %576 = vmatpush.msra.mxu0 0.0
    %577 = vmatpush.msra.mxu0 0.0
    %578 = vmatpush.msra.mxu0 0.0
    %579 = vmatpush.msra.mxu0 0.0
    %580 = vmatpush.msra.mxu0 0.0
    %581 = vmatpush.msra.mxu0 0.0
    %582 = vmatpush.msra.mxu0 0.0
    %583 = vmatpush.msra.mxu0 %v563
    %584 = vmatpush.msra.mxu0 %v561
    %585 = vmatmul.f32.gmra.mxu0 %v567
    %v586 = vpop.f32.mrf.mxu0
    %v587 = vadd.f32 0.0, %v586
    %588 = vdwg.mxu0
    %589 = vmatpush.msra.mxu0 0.0
    %590 = vmatpush.msra.mxu0 0.0
    %591 = vmatpush.msra.mxu0 0.0
    %592 = vmatpush.msra.mxu0 0.0
    %593 = vmatpush.msra.mxu0 0.0
    %594 = vmatpush.msra.mxu0 0.0
    %595 = vmatpush.msra.mxu0 0.0
    %596 = vmatpush.msra.mxu0 0.0
    %597 = vmatpush.msra.mxu0 0.0
    %598 = vmatpush.msra.mxu0 0.0
    %599 = vmatpush.msra.mxu0 0.0
    %600 = vmatpush.msra.mxu0 0.0
    %601 = vmatpush.msra.mxu0 0.0
    %602 = vmatpush.msra.mxu0 0.0
    %603 = vmatpush.msra.mxu0 %v564
    %604 = vmatpush.msra.mxu0 %v562
    %605 = vmatmul.f32.gmra.mxu0 %v567
    %v606 = vpop.f32.mrf.mxu0
    %v607 = vadd.f32 0.0, %v606
    %608 = vdwg.mxu0
    %v609 = vadd.f32 %v539, %v587
    %v610 = vadd.f32 %v559, %v607
    %v611 = vld [vmem:[%s7] sm:$0x1]
    %v612 = vperm.slane %v611, 0
    %v613 = vadd.f32 %v609, %v612
    %vm614 = vcmp.gt.f32.partialorder %v613, 0.0
    %v615 = vmul.f32 %v613, 0.01
    %v616 = vsel %vm614, %v613, %v615
    %v617 = vld [vmem:[%s7 + $0x1] sm:$0x1]
    %v618 = vperm.slane %v617, 0
    %v619 = vadd.f32 %v610, %v618
    %v620 = vmax.f32 %v619, 0.0
    %v621 = vld [vmem:[%s5] sm:$0xff]
    %v622 = vld [vmem:[%s5 + $0x8] sm:$0xff]
    %v623 = vld [vmem:[%s5 + $0x10] sm:$0xff]
    %v624 = vld [vmem:[%s5 + $0x18] sm:$0xff]
    %v625 = vld [vmem:[%s5 + $0x20] sm:$0xff]
    %v626 = vld [vmem:[%s5 + $0x28] sm:$0xff]
    %v627 = vld [vmem:[%s5 + $0x30] sm:$0xff]
    %v628 = vld [vmem:[%s5 + $0x38] sm:$0xff]
    %v629 = vld [vmem:[%s5 + $0x40] sm:$0xff]
    %v630 = vld [vmem:[%s5 + $0x48] sm:$0xff]
    %v631 = vld [vmem:[%s5 + $0x50] sm:$0xff]
    %v632 = vld [vmem:[%s5 + $0x58] sm:$0xff]
    %v633 = vld [vmem:[%s5 + $0x60] sm:$0xff]
    %v634 = vld [vmem:[%s5 + $0x68] sm:$0xff]
    %v635 = vld [vmem:[%s5 + $0x70] sm:$0xff]
    %v636 = vld [vmem:[%s5 + $0x78] sm:$0xff]
    %v637 = vld [vmem:[%s7 + $0x2] sm:$0x1]
    %v638 = vperm.slane %v637, 0
    %639 = vmatpush.msra.mxu0 %v636
    %640 = vmatpush.msra.mxu0 %v635
    %641 = vmatpush.msra.mxu0 %v634
    %642 = vmatpush.msra.mxu0 %v633
    %643 = vmatpush.msra.mxu0 %v632
    %644 = vmatpush.msra.mxu0 %v631
    %645 = vmatpush.msra.mxu0 %v630
    %646 = vmatpush.msra.mxu0 %v629
    %647 = vmatpush.msra.mxu0 %v628
    %648 = vmatpush.msra.mxu0 %v627
    %649 = vmatpush.msra.mxu0 %v626
    %650 = vmatpush.msra.mxu0 %v625
    %651 = vmatpush.msra.mxu0 %v624
    %652 = vmatpush.msra.mxu0 %v623
    %653 = vmatpush.msra.mxu0 %v622
    %654 = vmatpush.msra.mxu0 %v621
    %655 = vmatmul.f32.gmra.mxu0 %v616
    %v656 = vpop.f32.mrf.mxu0
    %v657 = vadd.f32 %v638, %v656
    %658 = vdwg.mxu0
    %vm659 = vcmp.gt.f32.partialorder %v657, 0.0
    %v660 = vmul.f32 %v657, 0.01
    %v661 = vsel %vm659, %v657, %v660
    %s662 = scalar_lea.vmem %s5, 128
    %v663 = vld [vmem:[%s662] sm:$0xff]
    %v664 = vld [vmem:[%s662 + $0x8] sm:$0xff]
    %v665 = vld [vmem:[%s662 + $0x10] sm:$0xff]
    %v666 = vld [vmem:[%s662 + $0x18] sm:$0xff]
    %v667 = vld [vmem:[%s662 + $0x20] sm:$0xff]
    %v668 = vld [vmem:[%s662 + $0x28] sm:$0xff]
    %v669 = vld [vmem:[%s662 + $0x30] sm:$0xff]
    %v670 = vld [vmem:[%s662 + $0x38] sm:$0xff]
    %v671 = vld [vmem:[%s662 + $0x40] sm:$0xff]
    %v672 = vld [vmem:[%s662 + $0x48] sm:$0xff]
    %v673 = vld [vmem:[%s662 + $0x50] sm:$0xff]
    %v674 = vld [vmem:[%s662 + $0x58] sm:$0xff]
    %v675 = vld [vmem:[%s662 + $0x60] sm:$0xff]
    %v676 = vld [vmem:[%s662 + $0x68] sm:$0xff]
    %v677 = vld [vmem:[%s662 + $0x70] sm:$0xff]
    %v678 = vld [vmem:[%s662 + $0x78] sm:$0xff]
    %v679 = vld [vmem:[%s7 + $0x3] sm:$0x1]
    %v680 = vperm.slane %v679, 0
    %681 = vmatpush.msra.mxu0 %v678
    %682 = vmatpush.msra.mxu0 %v677
    %683 = vmatpush.msra.mxu0 %v676
    %684 = vmatpush.msra.mxu0 %v675
    %685 = vmatpush.msra.mxu0 %v674
    %686 = vmatpush.msra.mxu0 %v673
    %687 = vmatpush.msra.mxu0 %v672
    %688 = vmatpush.msra.mxu0 %v671
    %689 = vmatpush.msra.mxu0 %v670
    %690 = vmatpush.msra.mxu0 %v669
    %691 = vmatpush.msra.mxu0 %v668
    %692 = vmatpush.msra.mxu0 %v667
    %693 = vmatpush.msra.mxu0 %v666
    %694 = vmatpush.msra.mxu0 %v665
    %695 = vmatpush.msra.mxu0 %v664
    %696 = vmatpush.msra.mxu0 %v663
    %697 = vmatmul.f32.gmra.mxu0 %v661
    %v698 = vpop.f32.mrf.mxu0
    %v699 = vadd.f32 %v680, %v698
    %700 = vdwg.mxu0
    %vm701 = vcmp.gt.f32.partialorder %v699, 0.0
    %v702 = vmul.f32 %v699, 0.01
    %v703 = vsel %vm701, %v699, %v702
    %s704 = scalar_lea.vmem %s5, 256
    %v705 = vld [vmem:[%s704] sm:$0xff]
    %v706 = vld [vmem:[%s704 + $0x8] sm:$0xff]
    %v707 = vld [vmem:[%s704 + $0x10] sm:$0xff]
    %v708 = vld [vmem:[%s704 + $0x18] sm:$0xff]
    %v709 = vld [vmem:[%s704 + $0x20] sm:$0xff]
    %v710 = vld [vmem:[%s704 + $0x28] sm:$0xff]
    %v711 = vld [vmem:[%s704 + $0x30] sm:$0xff]
    %v712 = vld [vmem:[%s704 + $0x38] sm:$0xff]
    %v713 = vld [vmem:[%s704 + $0x40] sm:$0xff]
    %v714 = vld [vmem:[%s704 + $0x48] sm:$0xff]
    %v715 = vld [vmem:[%s704 + $0x50] sm:$0xff]
    %v716 = vld [vmem:[%s704 + $0x58] sm:$0xff]
    %v717 = vld [vmem:[%s704 + $0x60] sm:$0xff]
    %v718 = vld [vmem:[%s704 + $0x68] sm:$0xff]
    %v719 = vld [vmem:[%s704 + $0x70] sm:$0xff]
    %v720 = vld [vmem:[%s704 + $0x78] sm:$0xff]
    %v721 = vld [vmem:[%s7 + $0x4] sm:$0x1]
    %v722 = vperm.slane %v721, 0
    %723 = vmatpush.msra.mxu0 %v720
    %724 = vmatpush.msra.mxu0 %v719
    %725 = vmatpush.msra.mxu0 %v718
    %726 = vmatpush.msra.mxu0 %v717
    %727 = vmatpush.msra.mxu0 %v716
    %728 = vmatpush.msra.mxu0 %v715
    %729 = vmatpush.msra.mxu0 %v714
    %730 = vmatpush.msra.mxu0 %v713
    %731 = vmatpush.msra.mxu0 %v712
    %732 = vmatpush.msra.mxu0 %v711
    %733 = vmatpush.msra.mxu0 %v710
    %734 = vmatpush.msra.mxu0 %v709
    %735 = vmatpush.msra.mxu0 %v708
    %736 = vmatpush.msra.mxu0 %v707
    %737 = vmatpush.msra.mxu0 %v706
    %738 = vmatpush.msra.mxu0 %v705
    %739 = vmatmul.f32.gmra.mxu0 %v620
    %v740 = vpop.f32.mrf.mxu0
    %v741 = vadd.f32 %v722, %v740
    %742 = vdwg.mxu0
    %v743 = vmax.f32 %v741, 0.0
    %v744 = vld [vmem:[%s6] sm:$0xff]
    %v745 = vld [vmem:[%s6 + $0x8] sm:$0xff]
    %v746 = vld [vmem:[%s6 + $0x10] sm:$0xff]
    %v747 = vld [vmem:[%s6 + $0x18] sm:$0xff]
    %v748 = vld [vmem:[%s6 + $0x20] sm:$0xff]
    %v749 = vld [vmem:[%s6 + $0x28] sm:$0xff]
    %v750 = vld [vmem:[%s6 + $0x30] sm:$0xff]
    %v751 = vld [vmem:[%s6 + $0x38] sm:$0xff]
    %v752 = vld [vmem:[%s6 + $0x40] sm:$0xff]
    %v753 = vld [vmem:[%s6 + $0x48] sm:$0xff]
    %v754 = vld [vmem:[%s6 + $0x50] sm:$0xff]
    %v755 = vld [vmem:[%s6 + $0x58] sm:$0xff]
    %v756 = vld [vmem:[%s6 + $0x60] sm:$0xff]
    %v757 = vld [vmem:[%s6 + $0x68] sm:$0xff]
    %v758 = vld [vmem:[%s6 + $0x70] sm:$0xff]
    %v759 = vld [vmem:[%s6 + $0x78] sm:$0xff]
    %v760 = vld [vmem:[%s6 + $0x80] sm:$0xff]
    %v761 = vld [vmem:[%s6 + $0x88] sm:$0xff]
    %v762 = vld [vmem:[%s6 + $0x90] sm:$0xff]
    %v763 = vld [vmem:[%s6 + $0x98] sm:$0xff]
    %v764 = vld [vmem:[%s6 + $0xa0] sm:$0xff]
    %v765 = vld [vmem:[%s6 + $0xa8] sm:$0xff]
    %v766 = vld [vmem:[%s6 + $0xb0] sm:$0xff]
    %v767 = vld [vmem:[%s6 + $0xb8] sm:$0xff]
    %v768 = vld [vmem:[%s6 + $0xc0] sm:$0xff]
    %v769 = vld [vmem:[%s6 + $0xc8] sm:$0xff]
    %v770 = vld [vmem:[%s6 + $0xd0] sm:$0xff]
    %v771 = vld [vmem:[%s6 + $0xd8] sm:$0xff]
    %v772 = vld [vmem:[%s6 + $0xe0] sm:$0xff]
    %v773 = vld [vmem:[%s6 + $0xe8] sm:$0xff]
    %v774 = vld [vmem:[%s6 + $0xf0] sm:$0xff]
    %v775 = vld [vmem:[%s6 + $0xf8] sm:$0xff]
    %776 = vmatpush.msra.mxu0 %v775
    %777 = vmatpush.msra.mxu0 %v774
    %778 = vmatpush.msra.mxu0 %v773
    %779 = vmatpush.msra.mxu0 %v772
    %780 = vmatpush.msra.mxu0 %v771
    %781 = vmatpush.msra.mxu0 %v770
    %782 = vmatpush.msra.mxu0 %v769
    %783 = vmatpush.msra.mxu0 %v768
    %784 = vmatpush.msra.mxu0 %v767
    %785 = vmatpush.msra.mxu0 %v766
    %786 = vmatpush.msra.mxu0 %v765
    %787 = vmatpush.msra.mxu0 %v764
    %788 = vmatpush.msra.mxu0 %v763
    %789 = vmatpush.msra.mxu0 %v762
    %790 = vmatpush.msra.mxu0 %v761
    %791 = vmatpush.msra.mxu0 %v760
    %792 = vmatmul.f32.gmra.mxu0 %v743
    %v793 = vpop.f32.mrf.mxu0
    %v794 = vadd.f32 0.0, %v793
    %795 = vdwg.mxu0
    %796 = vmatpush.msra.mxu0 %v759
    %797 = vmatpush.msra.mxu0 %v758
    %798 = vmatpush.msra.mxu0 %v757
    %799 = vmatpush.msra.mxu0 %v756
    %800 = vmatpush.msra.mxu0 %v755
    %801 = vmatpush.msra.mxu0 %v754
    %802 = vmatpush.msra.mxu0 %v753
    %803 = vmatpush.msra.mxu0 %v752
    %804 = vmatpush.msra.mxu0 %v751
    %805 = vmatpush.msra.mxu0 %v750
    %806 = vmatpush.msra.mxu0 %v749
    %807 = vmatpush.msra.mxu0 %v748
    %808 = vmatpush.msra.mxu0 %v747
    %809 = vmatpush.msra.mxu0 %v746
    %810 = vmatpush.msra.mxu0 %v745
    %811 = vmatpush.msra.mxu0 %v744
    %812 = vmatmul.f32.gmra.mxu0 %v703
    %v813 = vpop.f32.mrf.mxu0
    %v814 = vadd.f32 %v794, %v813
    %815 = vdwg.mxu0
    %v816 = vld [vmem:[%s7 + $0x5] sm:$0x1]
    %v817 = vperm.slane %v816, 0
    %v818 = vadd.f32 %v814, %v817
    %819 = vst [vmem:[%s8] sm:$0x3] %v818
  $region41: #{finetune_ende_forward.1} parent=0 // pred_fallthru
    _
  // Predicated region
  $region42: #{finetune_ende_forward.1} parent=0 // pred_check
    _
  $region43: #{finetune_ende_forward.1} parent=0 // pred_check_branch
    %821 = sbr.rel (0) target = $region45
  $region44: #{finetune_ende_forward.1} parent=0 // pred_region
    _
  $region45: #{finetune_ende_forward.1} parent=0 // pred_fallthru
    _
  // Predicated region
  $region46: #{finetune_ende_forward.1} parent=0 // pred_check
    _
  $region47: #{finetune_ende_forward.1} parent=0 // pred_check_branch
    %823 = sbr.rel (0) target = $region49
  $region48: #{finetune_ende_forward.1} parent=0 // pred_region
    _
  $region49: #{finetune_ende_forward.1} parent=0 // pred_fallthru
    _

</llo_original>
